<compile_context>
chip_gen: v6e
topology: v6e:2x2x1
jax: 0.10.0
libtpu: 0.0.40
codegen_flags: <defaults>
</compile_context>

<pallas_src>
import functools

import numpy as np

import jax
import jax.numpy as jnp
from jax import lax
from jax.experimental import pallas as pl
from jax.experimental.pallas import tpu as pltpu


_CHUNK = 256            # lane width of the cumsum sub-chunk; tri scratch = 256*256 bf16 = 128 KiB
_MAX_TB = 2048          # kernel-2 block along the sorted-pixel axis (multiple of _CHUNK)
_MAX_TILE = 16384       # kernel-1 block along the pixel axis (multiple of _MAX_TB)
_VMEM_LIMIT = 48 * 1024 * 1024   # explicit scoped-VMEM limit; leaves headroom on v7x (64 MiB)


def _softmax_errs_kernel(logits_ref, label_ref, errs_ref, key_ref, oh_ref, *, ignore_index):
    # logits_ref: (C, TILE) f32 ; label_ref: (1, TILE) i32
    x = logits_ref[...]
    lbl = label_ref[...]
    m = jnp.max(x, axis=0, keepdims=True)
    e = jnp.exp(x - m)
    probs = e / jnp.sum(e, axis=0, keepdims=True)              # softmax over class axis
    cls = lax.broadcasted_iota(jnp.int32, x.shape, 0)
    onehot = (cls == lbl).astype(jnp.float32)
    errs = jnp.abs(onehot - probs)
    valid = lbl != ignore_index                                 # padded cols carry ignore_index

    errs_ref[...] = errs                                        # unmasked, returned to caller
    key_ref[...] = jnp.where(valid, -errs, 1.0)                 # invalid cols sort last
    oh_ref[...] = jnp.where(valid, onehot, 0.0).astype(jnp.bfloat16)


def _lovasz_grad_kernel(key_ref, oh_ref, npos_ref, losses_ref,
                        carry_ref, acc_ref, tri_ref):
    # key_ref: (C, TB) f32 sorted keys (errs = max(-key, 0)); oh_ref: (C, TB) bf16 sorted one-hot.
    # npos_ref:  (C, 1) total positives per class (global).
    # carry_ref: (C, 1) running count of positives in all previous sorted positions.
    # acc_ref:   (C, 1) running loss accumulator.
    # tri_ref:   (CHUNK, CHUNK) bf16 scratch, tri[k, j] = 1 iff k <= j (built once at step 0).
    i = pl.program_id(0)
    _, TB = key_ref.shape
    CH = tri_ref.shape[0]

    @pl.when(i == 0)
    def _init():
        carry_ref[...] = jnp.zeros_like(carry_ref)
        acc_ref[...] = jnp.zeros_like(acc_ref)
        row = lax.broadcasted_iota(jnp.int32, (CH, CH), 0)
        col = lax.broadcasted_iota(jnp.int32, (CH, CH), 1)
        tri_ref[...] = (row <= col).astype(jnp.bfloat16)

    n_pos = npos_ref[...]                                       # (C, 1)
    tri = tri_ref[...]                                          # hoisted: read once per step
    base = i * TB

    def chunk(k, carries):
        carry, acc = carries                                    # (C, 1) f32 each
        start = pl.multiple_of(k * CH, CH)
        key = key_ref[:, pl.ds(start, CH)]
        oh_bf = oh_ref[:, pl.ds(start, CH)]
        errs = jnp.maximum(-key, 0.0)                           # ignored/padded cols -> 0
        oh = oh_bf.astype(jnp.float32)

        # Chunk-local cumsum along the sorted axis via a fixed 256-wide MXU matmul; bf16 0/1
        # operands with f32 accumulation are exact.  Global cumsum = local + carry.
        local_cum = jnp.dot(oh_bf, tri, preferred_element_type=jnp.float32)   # (C, CH)
        cum_oh = local_cum + carry

        pos_i = lax.broadcasted_iota(jnp.int32, (1, CH), 1) + (base + start)  # global position
        pos = pos_i.astype(jnp.float32)

        # jacc[j] = 1 - (n_pos - cumsum(oh)[j]) / (n_pos + cumsum(1-oh)[j])
        jacc = 1.0 - (n_pos - cum_oh) / (n_pos + (pos + 1.0) - cum_oh)
        cum_prev = cum_oh - oh
        # NOTE: when n_pos == 0 the discarded branch at global position 0 is 0/0 = NaN; the
        # jnp.where vector-select drops it, so the result stays finite.  Do not hoist the divide.
        jacc_prev = jnp.where(pos_i == 0, 0.0,
                              1.0 - (n_pos - cum_prev) / (n_pos + pos - cum_prev))

        acc = acc + jnp.sum(errs * (jacc - jacc_prev), axis=1, keepdims=True)
        carry = carry + jnp.sum(oh, axis=1, keepdims=True)
        return carry, acc

    carry, acc = lax.fori_loop(0, TB // CH, chunk,
                               (carry_ref[...], acc_ref[...]), unroll=True)
    carry_ref[...] = carry
    acc_ref[...] = acc

    @pl.when(i == pl.num_programs(0) - 1)
    def _finalize():
        losses_ref[...] = acc


def lovasz_softmax_v1(logits, label, reduction="mean", ignore_index=-100):
    n, c, h, w = logits.shape
    N = n * h * w

    # Tile plumbing: N_pad is a multiple of TILE; TILE is a multiple of TB; TB a multiple of CHUNK.
    N_ceil = pl.cdiv(N, _CHUNK) * _CHUNK
    TB = min(_MAX_TB, N_ceil)
    TILE = min(_MAX_TILE, pl.cdiv(N, TB) * TB)
    N_pad = pl.cdiv(N, TILE) * TILE
    pad = N_pad - N

    logits2d = jnp.transpose(logits, (1, 0, 2, 3)).reshape(c, N).astype(jnp.float32)
    label1d = label.reshape(N).astype(jnp.int32)
    if pad:
        logits2d = jnp.pad(logits2d, ((0, 0), (0, pad)))
        label1d = jnp.pad(label1d, (0, pad), constant_values=ignore_index)

    # Kernel 1: softmax + errs + fused masking (sort key + bf16 one-hot).
    errs_full, neg_key, oh_m = pl.pallas_call(
        functools.partial(_softmax_errs_kernel, ignore_index=ignore_index),
        out_shape=(jax.ShapeDtypeStruct((c, N_pad), jnp.float32),
                   jax.ShapeDtypeStruct((c, N_pad), jnp.float32),
                   jax.ShapeDtypeStruct((c, N_pad), jnp.bfloat16)),
        grid=(N_pad // TILE,),
        in_specs=[pl.BlockSpec((c, TILE), lambda i: (0, i)),
                  pl.BlockSpec((1, TILE), lambda i: (0, i))],
        out_specs=(pl.BlockSpec((c, TILE), lambda i: (0, i)),
                   pl.BlockSpec((c, TILE), lambda i: (0, i)),
                   pl.BlockSpec((c, TILE), lambda i: (0, i))),
        compiler_params=pltpu.CompilerParams(
            dimension_semantics=("parallel",),
            vmem_limit_bytes=_VMEM_LIMIT),
    )(logits2d, label1d[None, :])

    # TODO(synk): torch drops ignore_index columns via nonzero() (dynamic shape); here `errs`
    # keeps the full (c, N) width and ignored columns contribute exactly 0 to the loss.
    errs = errs_full[:, :N]

    # Glue: one 2-operand descending sort (key + bf16 one-hot payload); errs_sort is recovered
    # inside kernel 2 from the sorted key, so no f32 errs payload moves through the sort.
    key_sort, oh_sort = lax.sort((neg_key, oh_m), dimension=1, num_keys=1, is_stable=False)
    n_pos = jnp.sum(oh_sort.astype(jnp.float32), axis=1, keepdims=True)        # (c, 1)

    nb = N_pad // TB
    # TODO(synk): on v7x a leading class-split "parallel" axis would use both TensorCores; with
    # small c it requires padding classes to a (8,128)-legal split, so it is omitted here.
    losses = pl.pallas_call(
        _lovasz_grad_kernel,
        out_shape=jax.ShapeDtypeStruct((c, 1), jnp.float32),
        grid=(nb,),
        in_specs=[pl.BlockSpec((c, TB), lambda i: (0, i)),
                  pl.BlockSpec((c, TB), lambda i: (0, i)),
                  pl.BlockSpec((c, 1), lambda i: (0, 0))],
        out_specs=pl.BlockSpec((c, 1), lambda i: (0, 0)),
        scratch_shapes=[pltpu.VMEM((c, 1), jnp.float32),          # carry: cum positives
                        pltpu.VMEM((c, 1), jnp.float32),          # loss accumulator
                        pltpu.VMEM((_CHUNK, _CHUNK), jnp.bfloat16)],  # fixed tri operator
        compiler_params=pltpu.CompilerParams(
            dimension_semantics=("arbitrary",),
            vmem_limit_bytes=_VMEM_LIMIT),
    )(key_sort, oh_sort, n_pos)

    losses = losses[:, 0]
    if reduction == "sum":
        losses = losses.sum()
    elif reduction == "mean":
        losses = losses.mean()
    return losses, errs


def _lovasz_ref(logits, label, ignore_index=-100):
    """Pure-JAX/numpy mirror of the PyTorch forward (concrete arrays only, not jittable)."""
    n, c, h, w = logits.shape
    lg = jnp.transpose(logits, (1, 0, 2, 3)).reshape(c, -1).astype(jnp.float32)
    lb = np.asarray(label).reshape(-1)
    keep = lb != ignore_index
    probs = jax.nn.softmax(lg, axis=0)[:, keep]
    lb = jnp.asarray(lb[keep])
    oh = (lb[None, :] == jnp.arange(c)[:, None]).astype(jnp.float32)
    errs = jnp.abs(oh - probs)
    order = jnp.argsort(-errs, axis=1)
    errs_sort = jnp.take_along_axis(errs, order, axis=1)
    oh_sort = jnp.take_along_axis(oh, order, axis=1)
    n_pos = oh_sort.sum(axis=1, keepdims=True)
    inter = n_pos - jnp.cumsum(oh_sort, axis=1)
    union = n_pos + jnp.cumsum(1.0 - oh_sort, axis=1)
    jacc = 1.0 - inter / union
    jacc = jnp.concatenate([jacc[:, :1], jacc[:, 1:] - jacc[:, :-1]], axis=1)
    losses = jnp.sum(errs_sort * jacc, axis=1)
    return losses.mean(), errs


if __name__ == "__main__":
    key = jax.random.PRNGKey(0)
    k1, k2, k3, k4, k5 = jax.random.split(key, 5)

    # Case 1: no ignored labels (matches the torch docstring usage at a small shape).
    n, c, h, w = 2, 4, 16, 16
    logits = jax.random.normal(k1, (n, c, h, w), dtype=jnp.float32)
    label = jax.random.randint(k2, (n, h, w), 0, c, dtype=jnp.int32)

    loss, errs = lovasz_softmax_v1(logits, label)
    jax.block_until_ready((loss, errs))

    ref_loss, ref_errs = _lovasz_ref(logits, label)
    assert errs.shape == (c, n * h * w) and loss.shape == ()
    assert jnp.allclose(loss, ref_loss, atol=1e-5), (loss, ref_loss)
    assert jnp.allclose(errs, ref_errs, atol=1e-5)

    # Case 2: ignore_index + padding + multiple kernel-2 grid blocks (exercises the carry).
    n2, c2, h2, w2 = 2, 4, 40, 32
    logits2 = jax.random.normal(k3, (n2, c2, h2, w2), dtype=jnp.float32)
    label2 = jax.random.randint(k4, (n2, h2, w2), 0, c2, dtype=jnp.int32)
    drop = jax.random.uniform(k5, (n2, h2, w2)) < 0.2
    label2 = jnp.where(drop, -100, label2)

    loss2, errs2 = lovasz_softmax_v1(logits2, label2)
    jax.block_until_ready((loss2, errs2))
    ref_loss2, _ = _lovasz_ref(logits2, label2)
    assert jnp.allclose(loss2, ref_loss2, atol=3e-5), (loss2, ref_loss2)

    print("KERNEL_OK")
</pallas_src>

<mosaic_0001>
module attributes {stable_mosaic.version = 11 : i64} {
  func.func @_softmax_errs_kernel(%arg0: i32, %arg1: memref<4x512xf32, #tpu.memory_space<vmem>>, %arg2: memref<1x512xi32, #tpu.memory_space<vmem>>, %arg3: memref<4x512xf32, #tpu.memory_space<vmem>>, %arg4: memref<4x512xf32, #tpu.memory_space<vmem>>, %arg5: memref<4x512xbf16, #tpu.memory_space<vmem>>) attributes {dimension_semantics = [#tpu.dimension_semantics<parallel>], iteration_bounds = array<i64: 1>, scalar_prefetch = 0 : i64, scratch_operands = 0 : i64, tpu.core_type = #tpu.core_type<tc>, window_params = [{transform_indices = @transform_0, window_bounds = array<i64: 4, 512>}, {transform_indices = @transform_1, window_bounds = array<i64: 1, 512>}, {transform_indices = @transform_2, window_bounds = array<i64: 4, 512>}, {transform_indices = @transform_3, window_bounds = array<i64: 4, 512>}, {transform_indices = @transform_4, window_bounds = array<i64: 4, 512>}]} {
    %c0 = arith.constant 0 : index
    %c0_0 = arith.constant 0 : index
    %0 = vector.load %arg1[%c0, %c0_0] : memref<4x512xf32, #tpu.memory_space<vmem>>, vector<4x512xf32>
    %c0_1 = arith.constant 0 : index
    %c0_2 = arith.constant 0 : index
    %1 = vector.load %arg2[%c0_1, %c0_2] : memref<1x512xi32, #tpu.memory_space<vmem>>, vector<1x512xi32>
    %cst = arith.constant dense<0xFF800000> : vector<512xf32>
    %2 = vector.multi_reduction <maximumf>, %0, %cst [0] : vector<4x512xf32> to vector<512xf32>
    %3 = vector.shape_cast %2 : vector<512xf32> to vector<1x512xf32>
    %4 = vector.broadcast %3 : vector<1x512xf32> to vector<4x512xf32>
    %5 = arith.subf %0, %4 : vector<4x512xf32>
    %6 = math.exp %5 : vector<4x512xf32>
    %cst_3 = arith.constant dense<0.000000e+00> : vector<512xf32>
    %7 = vector.multi_reduction <add>, %6, %cst_3 [0] : vector<4x512xf32> to vector<512xf32>
    %8 = vector.shape_cast %7 : vector<512xf32> to vector<1x512xf32>
    %9 = vector.broadcast %8 : vector<1x512xf32> to vector<4x512xf32>
    %10 = arith.divf %6, %9 : vector<4x512xf32>
    %11 = tpu.iota {dimensions = array<i32: 0>} : vector<4x512xi32>
    %12 = vector.broadcast %1 : vector<1x512xi32> to vector<4x512xi32>
    %13 = arith.cmpi eq, %11, %12 : vector<4x512xi32>
    %14 = arith.extui %13 : vector<4x512xi1> to vector<4x512xi32>
    %15 = arith.sitofp %14 : vector<4x512xi32> to vector<4x512xf32>
    %16 = arith.subf %15, %10 : vector<4x512xf32>
    %17 = math.absf %16 : vector<4x512xf32>
    %c-100_i32 = arith.constant -100 : i32
    %18 = vector.broadcast %c-100_i32 : i32 to vector<1x512xi32>
    %19 = arith.cmpi ne, %1, %18 : vector<1x512xi32>
    %c0_4 = arith.constant 0 : index
    %c0_5 = arith.constant 0 : index
    %20 = vector.load %arg3[%c0_4, %c0_5] : memref<4x512xf32, #tpu.memory_space<vmem>>, vector<4x512xf32>
    tpu.vector_store %arg3[%c0_4, %c0_5], %17 {strides = array<i32>} : memref<4x512xf32, #tpu.memory_space<vmem>>, vector<4x512xf32>,
    %cst_6 = arith.constant 0.000000e+00 : f32
    %21 = vector.broadcast %cst_6 : f32 to vector<4x512xf32>
    %22 = arith.subf %21, %17 : vector<4x512xf32>
    %cst_7 = arith.constant 1.000000e+00 : f32
    %23 = vector.shape_cast %19 : vector<1x512xi1> to vector<1x512xi1>
    %24 = vector.broadcast %23 : vector<1x512xi1> to vector<4x512xi1>
    %25 = vector.broadcast %cst_7 : f32 to vector<4x512xf32>
    %26 = arith.select %24, %22, %25 : vector<4x512xi1>, vector<4x512xf32>
    %c0_8 = arith.constant 0 : index
    %c0_9 = arith.constant 0 : index
    %27 = vector.load %arg4[%c0_8, %c0_9] : memref<4x512xf32, #tpu.memory_space<vmem>>, vector<4x512xf32>
    tpu.vector_store %arg4[%c0_8, %c0_9], %26 {strides = array<i32>} : memref<4x512xf32, #tpu.memory_space<vmem>>, vector<4x512xf32>,
    %cst_10 = arith.constant 0.000000e+00 : f32
    %28 = vector.shape_cast %19 : vector<1x512xi1> to vector<1x512xi1>
    %29 = vector.broadcast %28 : vector<1x512xi1> to vector<4x512xi1>
    %30 = vector.broadcast %cst_10 : f32 to vector<4x512xf32>
    %31 = arith.select %29, %15, %30 : vector<4x512xi1>, vector<4x512xf32>
    %32 = arith.truncf %31 : vector<4x512xf32> to vector<4x512xbf16>
    %c0_11 = arith.constant 0 : index
    %c0_12 = arith.constant 0 : index
    %33 = vector.load %arg5[%c0_11, %c0_12] : memref<4x512xbf16, #tpu.memory_space<vmem>>, vector<4x512xbf16>
    tpu.vector_store %arg5[%c0_11, %c0_12], %32 {strides = array<i32>} : memref<4x512xbf16, #tpu.memory_space<vmem>>, vector<4x512xbf16>,
    return
  }
  func.func @transform_0(%arg0: i32) -> (i32, i32) {
    %c0_i32 = arith.constant 0 : i32
    %c0_i32_0 = arith.constant 0 : i32
    return %c0_i32, %arg0 : i32, i32
  }
  func.func @transform_1(%arg0: i32) -> (i32, i32) {
    %c0_i32 = arith.constant 0 : i32
    %c0_i32_0 = arith.constant 0 : i32
    return %c0_i32, %arg0 : i32, i32
  }
  func.func @transform_2(%arg0: i32) -> (i32, i32) {
    %c0_i32 = arith.constant 0 : i32
    %c0_i32_0 = arith.constant 0 : i32
    return %c0_i32, %arg0 : i32, i32
  }
  func.func @transform_3(%arg0: i32) -> (i32, i32) {
    %c0_i32 = arith.constant 0 : i32
    %c0_i32_0 = arith.constant 0 : i32
    return %c0_i32, %arg0 : i32, i32
  }
  func.func @transform_4(%arg0: i32) -> (i32, i32) {
    %c0_i32 = arith.constant 0 : i32
    %c0_i32_0 = arith.constant 0 : i32
    return %c0_i32, %arg0 : i32, i32
  }
}

</mosaic_0001>

<llo_original>
// kernel: tpu_custom_call.1
$region0: #{tpu_custom_call.1}
  #allocation0 [shape = 'u32[]', space=smem, size = 0x4, offset = 0x4, fixed_abs, tag = 'smem constant byte address 0x4 - core index']
  #allocation1 [shape = 'u32[144,128]{1,0:T(1,128)}', space=vmem, size = 0x12000, scoped, tag = 'internal scratch']
  %s0 = inlined_call_operand.hbm [shape: f32[4,512], index: 0, kind: input, shape index: {}]
  %s1 = inlined_call_operand.hbm [shape: s32[1,512], index: 1, kind: input, shape index: {}]
  %s2 = inlined_call_operand.hbm [shape: f32[4,512], index: 2, kind: output, shape index: {0}]
  %s3 = inlined_call_operand.hbm [shape: f32[4,512], index: 3, kind: output, shape index: {1}]
  %s4 = inlined_call_operand.hbm [shape: bf16[4,512], index: 4, kind: output, shape index: {2}]
  %5 = xla_tuple %s2, %s3, %s4
  %s6 = sld [smem:[#allocation0]]
  $region42: #{tpu_custom_call.1} parent=0
    _
  %s8 = ssub.s32 1, %s6
  %s9 = scalar_select 0, %s8, %s6
  $region1: #{tpu_custom_call.1} parent=0
    #allocation2 [shape = 'u8[8192]{0}', space=vmem, size = 0x2000, scoped, tag = 'input window, operand 0, single buffered']
    #allocation3 [shape = 's32[1]{0}', space=sflag, size = 0x4, scoped, tag = 'scoped memory for tpu_custom_call.1']
    #allocation4 [shape = 's32[1]{0}', space=sflag, size = 0x4, scoped, tag = 'scoped memory for tpu_custom_call.1']
    #allocation5 [shape = 'u8[2048]{0}', space=vmem, size = 0x800, scoped, tag = 'input window, operand 1, single buffered']
    #allocation6 [shape = 's32[1]{0}', space=sflag, size = 0x4, scoped, tag = 'scoped memory for tpu_custom_call.1']
    #allocation7 [shape = 'u8[8192]{0}', space=vmem, size = 0x2000, scoped, tag = 'output window, operand 0, single buffered']
    #allocation8 [shape = 'u8[8192]{0}', space=vmem, size = 0x2000, scoped, tag = 'output window, operand 1, single buffered']
    #allocation9 [shape = 's32[1]{0}', space=sflag, size = 0x4, scoped, tag = 'scoped memory for tpu_custom_call.1']
    #allocation10 [shape = 'u8[4096]{0}', space=vmem, size = 0x1000, scoped, tag = 'output window, operand 2, single buffered']
    %10 = vsyncpa [#allocation3], 0
    %11 = vsyncpa [#allocation6], 0
    %12 = vsyncpa [#allocation4], 0
    %13 = vsyncpa [#allocation9], 0
    // Predicated region
    $region2: #{tpu_custom_call.1} parent=1 // pred_check
      _
    $region3: #{tpu_custom_call.1} parent=1 // pred_check_branch
      %15 = sbr.rel (0) target = $region5
    $region4: #{tpu_custom_call.1} parent=1 // pred_region
      %s17 = ssub.s32 256, 256
      %18 = vsyncadd [#allocation3], %s17
      %s20 = sshll.u32 [#allocation2], 4
      %s21 = int_to_ptr.vmem [resolvable:$true] %s20
      %23 = dma.hbm_to_vmem [thread:$0]  %s0, 256, %s21, [#allocation3]
    $region5: #{tpu_custom_call.1} parent=1 // pred_fallthru
      _
    // Predicated region
    $region6: #{tpu_custom_call.1} parent=1 // pred_check
      _
    $region7: #{tpu_custom_call.1} parent=1 // pred_check_branch
      %25 = sbr.rel (0) target = $region9
    $region8: #{tpu_custom_call.1} parent=1 // pred_region
      %s27 = ssub.s32 64, 64
      %28 = vsyncadd [#allocation6], %s27
      %s30 = sshll.u32 [#allocation5], 4
      %s31 = int_to_ptr.vmem [resolvable:$true] %s30
      %33 = dma.hbm_to_vmem [thread:$0]  %s1, 64, %s31, [#allocation6]
    $region9: #{tpu_custom_call.1} parent=1 // pred_fallthru
      _
    // Predicated region
    $region10: #{tpu_custom_call.1} parent=1 // pred_check
      _
    $region11: #{tpu_custom_call.1} parent=1 // pred_check_branch
      %35 = sbr.rel (0) target = $region13
    $region12: #{tpu_custom_call.1} parent=1 // pred_region
      %36 = dma.done [#allocation3], 256
    $region13: #{tpu_custom_call.1} parent=1 // pred_fallthru
      _
    // Predicated region
    $region14: #{tpu_custom_call.1} parent=1 // pred_check
      _
    $region15: #{tpu_custom_call.1} parent=1 // pred_check_branch
      %38 = sbr.rel (0) target = $region17
    $region16: #{tpu_custom_call.1} parent=1 // pred_region
      %39 = dma.done [#allocation6], 64
    $region17: #{tpu_custom_call.1} parent=1 // pred_fallthru
      _
    %v40 = vld [vmem:[#allocation2] sm:$0xff]
    %v41 = vld [vmem:[#allocation2 + $0x8] sm:$0xff]
    %v42 = vld [vmem:[#allocation5] sm:$0xf]
    %v45 = vcombine.high %v40, %v40
    %v46 = vcombine.high %v41, %v41
    %vm49 = vcmask 1043456
    %v50 = vsel %vm49, %v40, -inf
    %v51 = vrot.slane %v50, 4
    %v52 = vmax.f32 %v50, %v51
    %v53 = vrot.slane %v52, 2
    %v54 = vmax.f32 %v52, %v53
    %v55 = vrot.slane %v54, 1
    %v56 = vmax.f32 %v54, %v55
    %v57 = vsel %vm49, %v45, -inf
    %v58 = vrot.slane %v57, 4
    %v59 = vmax.f32 %v57, %v58
    %v60 = vrot.slane %v59, 2
    %v61 = vmax.f32 %v59, %v60
    %v62 = vrot.slane %v61, 1
    %v63 = vmax.f32 %v61, %v62
    %v64 = vsel %vm49, %v41, -inf
    %v65 = vrot.slane %v64, 4
    %v66 = vmax.f32 %v64, %v65
    %v67 = vrot.slane %v66, 2
    %v68 = vmax.f32 %v66, %v67
    %v69 = vrot.slane %v68, 1
    %v70 = vmax.f32 %v68, %v69
    %v71 = vsel %vm49, %v46, -inf
    %v72 = vrot.slane %v71, 4
    %v73 = vmax.f32 %v71, %v72
    %v74 = vrot.slane %v73, 2
    %v75 = vmax.f32 %v73, %v74
    %v76 = vrot.slane %v75, 1
    %v77 = vmax.f32 %v75, %v76
    %v82 = vcombine.low %v56, %v63
    %v83 = vcombine.low %v70, %v77
    %v86 = vsub.f32 %v40, %v82
    %v87 = vsub.f32 %v41, %v83
    %v88 = vmul.f32 %v86, 1.442695
    %v89 = vpow.pop %v88
    %v90 = vmul.f32 %v87, 1.442695
    %v91 = vpow.pop %v90
    %v94 = vcombine.high %v89, %v89
    %v95 = vcombine.high %v91, %v91
    %v98 = vsel %vm49, %v89, 0.0
    %v99 = vrot.slane %v98, 4
    %v100 = vadd.f32 %v98, %v99
    %v101 = vrot.slane %v100, 2
    %v102 = vadd.f32 %v100, %v101
    %v103 = vrot.slane %v102, 1
    %v104 = vadd.f32 %v102, %v103
    %v105 = vsel %vm49, %v94, 0.0
    %v106 = vrot.slane %v105, 4
    %v107 = vadd.f32 %v105, %v106
    %v108 = vrot.slane %v107, 2
    %v109 = vadd.f32 %v107, %v108
    %v110 = vrot.slane %v109, 1
    %v111 = vadd.f32 %v109, %v110
    %v112 = vsel %vm49, %v91, 0.0
    %v113 = vrot.slane %v112, 4
    %v114 = vadd.f32 %v112, %v113
    %v115 = vrot.slane %v114, 2
    %v116 = vadd.f32 %v114, %v115
    %v117 = vrot.slane %v116, 1
    %v118 = vadd.f32 %v116, %v117
    %v119 = vsel %vm49, %v95, 0.0
    %v120 = vrot.slane %v119, 4
    %v121 = vadd.f32 %v119, %v120
    %v122 = vrot.slane %v121, 2
    %v123 = vadd.f32 %v121, %v122
    %v124 = vrot.slane %v123, 1
    %v125 = vadd.f32 %v123, %v124
    %v130 = vcombine.low %v104, %v111
    %v131 = vcombine.low %v118, %v125
    %v134 = vrcp.pop %v130
    %v135 = vmul.f32 %v89, %v134
    %v136 = vrcp.pop %v131
    %v137 = vmul.f32 %v91, %v136
    %v138 = vlaneseq
    %v139 = vshrl.u32 %v138, 7
    %v140 = vlaneseq
    %v141 = vshrl.u32 %v140, 7
    %v142 = vsub.s32 0, %v141
    %v143 = vrot.slane %v42, %v142
    %v144 = vlaneseq
    %v145 = vshrl.u32 %v144, 7
    %v146 = vsub.s32 1, %v145
    %v147 = vrot.slane %v42, %v146
    %v148 = vlaneseq
    %v149 = vshrl.u32 %v148, 7
    %v150 = vsub.s32 2, %v149
    %v151 = vrot.slane %v42, %v150
    %v152 = vlaneseq
    %v153 = vshrl.u32 %v152, 7
    %v154 = vsub.s32 3, %v153
    %v155 = vrot.slane %v42, %v154
    %vm156 = vcmp.eq.s32.totalorder %v139, %v143
    %vm157 = vcmp.eq.s32.totalorder %v139, %v147
    %vm158 = vcmp.eq.s32.totalorder %v139, %v151
    %vm159 = vcmp.eq.s32.totalorder %v139, %v155
    %v160 = vsel %vm156, 1, 0
    %v161 = vsel %vm157, 1, 0
    %v162 = vsel %vm158, 1, 0
    %v163 = vsel %vm159, 1, 0
    %v164 = vcvt.s32.f32 %v160
    %v165 = vcvt.s32.f32 %v161
    %v166 = vcvt.s32.f32 %v162
    %v167 = vcvt.s32.f32 %v163
    %v170 = vcombine.high %v135, %v135
    %v171 = vcombine.high %v137, %v137
    %v174 = vsub.f32 %v164, %v135
    %v175 = vsub.f32 %v165, %v170
    %v176 = vsub.f32 %v166, %v137
    %v177 = vsub.f32 %v167, %v171
    %v178 = vand.u32 2147483647, %v174
    %v179 = vand.u32 2147483647, %v175
    %v180 = vand.u32 2147483647, %v176
    %v181 = vand.u32 2147483647, %v177
    %vm182 = vcmp.ne.s32.totalorder %v42, 4294967196
    %v187 = vcombine.low %v178, %v179
    %v188 = vcombine.low %v180, %v181
    %191 = vst [vmem:[#allocation7] sm:$0xff] %v187
    %192 = vst [vmem:[#allocation7 + $0x8] sm:$0xff] %v188
    %v193 = vsub.f32 0.0, %v178
    %v194 = vsub.f32 0.0, %v179
    %v195 = vsub.f32 0.0, %v180
    %v196 = vsub.f32 0.0, %v181
    %v197 = vsel %vm182, 1, 0
    %v198 = vlaneseq
    %v199 = vshrl.u32 %v198, 7
    %v200 = vsub.s32 0, %v199
    %v201 = vrot.slane %v197, %v200
    %v202 = vlaneseq
    %v203 = vshrl.u32 %v202, 7
    %v204 = vsub.s32 1, %v203
    %v205 = vrot.slane %v197, %v204
    %v206 = vlaneseq
    %v207 = vshrl.u32 %v206, 7
    %v208 = vsub.s32 2, %v207
    %v209 = vrot.slane %v197, %v208
    %v210 = vlaneseq
    %v211 = vshrl.u32 %v210, 7
    %v212 = vsub.s32 3, %v211
    %v213 = vrot.slane %v197, %v212
    %vm214 = vcmp.eq.s32.totalorder %v201, 1
    %vm215 = vcmp.eq.s32.totalorder %v205, 1
    %vm216 = vcmp.eq.s32.totalorder %v209, 1
    %vm217 = vcmp.eq.s32.totalorder %v213, 1
    %v218 = vsel %vm214, %v193, 1.0
    %v219 = vsel %vm215, %v194, 1.0
    %v220 = vsel %vm216, %v195, 1.0
    %v221 = vsel %vm217, %v196, 1.0
    %v226 = vcombine.low %v218, %v219
    %v227 = vcombine.low %v220, %v221
    %230 = vst [vmem:[#allocation8] sm:$0xff] %v226
    %231 = vst [vmem:[#allocation8 + $0x8] sm:$0xff] %v227
    %v232 = vsel %vm214, %v164, 0.0
    %v233 = vsel %vm215, %v165, 0.0
    %v234 = vsel %vm216, %v166, 0.0
    %v235 = vsel %vm217, %v167, 0.0
    %v236 = vpack.c.bf16 %v232, %v232
    %v237 = vpack.c.bf16 %v233, %v233
    %v238 = vpack.c.bf16 %v234, %v234
    %v239 = vpack.c.bf16 %v235, %v235
    %v244 = vcombine.low %v236, %v237
    %v245 = vcombine.low %v238, %v239
    %v247 = vunpack.c.l.s4 1983009808
    %v248 = vunpack.c.0.s8 %v247
    %v249 = vlaneseq
    %v250 = vshrl.u32 %v249, 7
    %v251 = vsub.s32 %v248, %v250
    %v252 = vrot.slane %v244, %v251
    %v254 = vunpack.c.l.s4 1983009808
    %v255 = vunpack.c.0.s8 %v254
    %v256 = vlaneseq
    %v257 = vshrl.u32 %v256, 7
    %v258 = vsub.s32 %v255, %v257
    %v259 = vrot.slane %v245, %v258
    %v260 = vcombine.low %v252, %v259
    %262 = vst [vmem:[#allocation10] sm:$0xff] %v260
    // Predicated region
    $region18: #{tpu_custom_call.1} parent=1 // pred_check
      _
    $region19: #{tpu_custom_call.1} parent=1 // pred_check_branch
      %264 = sbr.rel (0) target = $region21
    $region20: #{tpu_custom_call.1} parent=1 // pred_region
      %s266 = ssub.s32 256, 256
      %267 = vsyncadd [#allocation4], %s266
      %s269 = sshll.u32 [#allocation7], 4
      %s270 = int_to_ptr.vmem [resolvable:$true] %s269
      %272 = dma.vmem_to_hbm [thread:$0]  %s270, 256, %s2, [#allocation4]
    $region21: #{tpu_custom_call.1} parent=1 // pred_fallthru
      _
    // Predicated region
    $region22: #{tpu_custom_call.1} parent=1 // pred_check
      _
    $region23: #{tpu_custom_call.1} parent=1 // pred_check_branch
      %274 = sbr.rel (0) target = $region25
    $region24: #{tpu_custom_call.1} parent=1 // pred_region
      %s276 = ssub.s32 256, 256
      %277 = vsyncadd [#allocation9], %s276
      %s279 = sshll.u32 [#allocation8], 4
      %s280 = int_to_ptr.vmem [resolvable:$true] %s279
      %282 = dma.vmem_to_hbm [thread:$0]  %s280, 256, %s3, [#allocation9]
    $region25: #{tpu_custom_call.1} parent=1 // pred_fallthru
      _
    // Predicated region
    $region26: #{tpu_custom_call.1} parent=1 // pred_check
      _
    $region27: #{tpu_custom_call.1} parent=1 // pred_check_branch
      %284 = sbr.rel (0) target = $region29
    $region28: #{tpu_custom_call.1} parent=1 // pred_region
      %s286 = ssub.s32 128, 128
      %287 = vsyncadd [#allocation9], %s286
      %s289 = sshll.u32 [#allocation10], 4
      %s290 = int_to_ptr.vmem [resolvable:$true] %s289
      %292 = dma.vmem_to_hbm [thread:$0]  %s290, 128, %s4, [#allocation9]
    $region29: #{tpu_custom_call.1} parent=1 // pred_fallthru
      _
    // Predicated region
    $region30: #{tpu_custom_call.1} parent=1 // pred_check
      _
    $region31: #{tpu_custom_call.1} parent=1 // pred_check_branch
      %294 = sbr.rel (0) target = $region33
    $region32: #{tpu_custom_call.1} parent=1 // pred_region
      %295 = dma.done [#allocation4], 256
    $region33: #{tpu_custom_call.1} parent=1 // pred_fallthru
      _
    // Predicated region
    $region34: #{tpu_custom_call.1} parent=1 // pred_check
      _
    $region35: #{tpu_custom_call.1} parent=1 // pred_check_branch
      %297 = sbr.rel (0) target = $region37
    $region36: #{tpu_custom_call.1} parent=1 // pred_region
      %298 = dma.done [#allocation9], 256
    $region37: #{tpu_custom_call.1} parent=1 // pred_fallthru
      _
    // Predicated region
    $region38: #{tpu_custom_call.1} parent=1 // pred_check
      _
    $region39: #{tpu_custom_call.1} parent=1 // pred_check_branch
      %300 = sbr.rel (0) target = $region41
    $region40: #{tpu_custom_call.1} parent=1 // pred_region
      %301 = dma.done [#allocation9], 128
    $region41: #{tpu_custom_call.1} parent=1 // pred_fallthru
      _
    %302 = vsyncpa [#allocation3], 1
    %303 = vsyncpa [#allocation6], 1
    %304 = vsyncpa [#allocation4], 1
    %305 = vsyncpa [#allocation9], 1

</llo_original>
